<compile_context>
chip_gen: v7x
topology: tpu7x:2x2x1
jax: 0.10.0
libtpu: 0.0.40
codegen_flags: <defaults>
</compile_context>

<pallas_src>
import numpy as np

import jax
import jax.numpy as jnp
from jax import lax
from jax.experimental import pallas as pl
from jax.experimental.pallas import tpu as pltpu


_CHUNK_F32_BYTES = 512 * 1024  # target f32 bytes per in-kernel temporary


def _round_down(x, m):
    return (x // m) * m


def _make_partial_kernel(block_rows, cb, W, HW, loss_type):
    """Builds a kernel computing per-block partial sums on a (block_rows, HW) tile.

    x_ref, t_ref : (block_rows, HW) VMEM tiles (input dtype, cast to f32 per chunk)
    out_ref      : (1, 2, 128) f32; row 0 = criterion partial sum (all lanes equal),
                   row 1 = TV partial sum.
    """
    n_full = block_rows // cb
    rem_rows = block_rows - n_full * cb

    def kernel(x_ref, t_ref, out_ref):
        # Lane-position masks over the flattened H*W axis, built once per step.
        #   position i = h*W + w
        #   dw[i] = x[i] - x[i-1]  -> valid only when w != 0   (i % W != 0)
        #   dh[i] = x[i] - x[i-W]  -> valid only when h != 0   (i >= W)
        pos = lax.broadcasted_iota(jnp.int32, (1, HW), 1)
        mask_w = (pos % W != 0).astype(jnp.float32)
        mask_h = (pos >= W).astype(jnp.float32)

        out_ref[...] = jnp.zeros_like(out_ref)

        def chunk_sums(r0, nrows):
            xs = x_ref[pl.ds(r0, nrows), :].astype(jnp.float32)
            ts = t_ref[pl.ds(r0, nrows), :].astype(jnp.float32)
            d = xs - ts
            if loss_type == "l1":
                crit = jnp.sum(jnp.abs(d))
            else:  # 'l2'
                crit = jnp.sum(d * d)
            # XLU rolls along the lane axis; each row is one complete image, so
            # rolls never mix images.  Wraparound / cross-row terms are removed
            # by the masks above.
            dw = xs - pltpu.roll(xs, 1, 1)
            dh = xs - pltpu.roll(xs, W, 1)
            tv = jnp.sum(dw * dw * mask_w) + jnp.sum(dh * dh * mask_h)
            return crit, tv

        def accumulate(crit, tv):
            # Direct stores into the resident output block (no concat / scratch).
            out_ref[0:1, 0:1, :] += crit
            out_ref[0:1, 1:2, :] += tv

        if n_full == 1:
            accumulate(*chunk_sums(0, cb))
        elif n_full > 1:
            def body(c, carry):
                r0 = pl.multiple_of(c * cb, 8) if cb % 8 == 0 else c * cb
                accumulate(*chunk_sums(r0, cb))
                return carry

            lax.fori_loop(0, n_full, body, 0)
        if rem_rows:
            accumulate(*chunk_sums(n_full * cb, rem_rows))

    return kernel


def _partial_sums(x2, t2, block_rows, cb, W, HW, loss_type, vmem_limit):
    """One pallas_call producing (nb, 2, 128) partial sums over row blocks."""
    nb = x2.shape[0] // block_rows
    kernel = _make_partial_kernel(block_rows, cb, W, HW, loss_type)
    return pl.pallas_call(
        kernel,
        out_shape=jax.ShapeDtypeStruct((nb, 2, 128), jnp.float32),
        grid_spec=pltpu.PrefetchScalarGridSpec(
            num_scalar_prefetch=0,
            grid=(nb,),
            in_specs=[
                pl.BlockSpec((block_rows, HW), lambda i: (i, 0)),
                pl.BlockSpec((block_rows, HW), lambda i: (i, 0)),
            ],
            out_specs=pl.BlockSpec((1, 2, 128), lambda i: (i, 0, 0)),
        ),
        compiler_params=pltpu.CompilerParams(
            dimension_semantics=("parallel",),
            vmem_limit_bytes=vmem_limit,
        ),
    )(x2, t2)


def loss_with_tv(inputs, targets, *, tv_wt, loss_type,
                 block_rows=None, chunk_rows=None):
    """Pallas implementation of lossWithTV.forward (4-D NCHW or 3-D inputs)."""
    if loss_type not in ("l1", "l2"):
        raise ValueError("Loss type not recognized")
    if inputs.shape != targets.shape:
        raise ValueError("inputs and targets must have the same shape")
    if inputs.ndim == 4:
        N, C, H, W = inputs.shape
        G = N * C
    elif inputs.ndim == 3:
        G, H, W = inputs.shape
    else:
        raise ValueError("expected 3-D or 4-D input")
    HW = H * W
    n_total = float(np.prod(inputs.shape))

    # Free (row-major) flatten: per-image pixels land on the 128-lane axis.
    x2 = jnp.reshape(inputs, (G, HW))
    t2 = jnp.reshape(targets, (G, HW))

    itemsize = jnp.dtype(inputs.dtype).itemsize
    hw_pad = -(-HW // 128) * 128
    row_in_bytes = hw_pad * itemsize
    row_f32_bytes = hw_pad * 4

    # ---- per-chip sizing (v5e/v6e: 128 MiB VMEM, v7x: 64 MiB) ----
    try:
        vmem_cap = int(getattr(pltpu.get_tpu_info(), "vmem_capacity_bytes",
                               64 << 20))
    except Exception:
        vmem_cap = 64 << 20                      # conservative fallback
    target_block_bytes = min(8 << 20, vmem_cap // 16)   # 8 MiB / 4 MiB per input

    # ---- tiling: DMA block (gb rows) decoupled from f32 temps (cb-row chunks) ----
    if G <= 8:
        gb = G                                    # single block == full array dims
    else:
        gb = max(8, _round_down(target_block_bytes // row_in_bytes, 8))
        gb = min(gb, max(8, _round_down(G // 4, 8)))   # keep >= ~4 grid steps
        gb = min(gb, _round_down(G, 8))
    cb = max(1, min(gb, _CHUNK_F32_BYTES // row_f32_bytes))
    if cb >= 8:
        cb = _round_down(cb, 8)

    # Optional tuning / test overrides.
    if block_rows is not None:
        gb = max(1, min(int(block_rows), G))
    if chunk_rows is not None:
        cb = max(1, int(chunk_rows))
    cb = min(cb, gb)

    nb = G // gb
    rem = G - nb * gb

    # VMEM budget: 2 inputs x 2 pipeline buffers + ~9 chunk-sized f32 temps + masks.
    vmem_needed = (4 * gb * row_in_bytes
                   + 9 * cb * row_f32_bytes
                   + 4 * row_f32_bytes
                   + (1 << 20))
    vmem_limit = int(min(vmem_cap * 0.90,
                         max(vmem_cap * 0.75, vmem_needed * 1.25)))

    parts = _partial_sums(x2, t2, gb, cb, W, HW, loss_type, vmem_limit)
    crit_sum = jnp.sum(parts[:, 0, 0])
    tv_sum = jnp.sum(parts[:, 1, 0])

    if rem:
        # Tail remainder: one extra tiny pallas_call on the tail slice instead of
        # padding / rewriting the full inputs in HBM.
        tail = _partial_sums(x2[nb * gb:], t2[nb * gb:], rem, min(cb, rem),
                             W, HW, loss_type, vmem_limit)
        crit_sum = crit_sum + tail[0, 0, 0]
        tv_sum = tv_sum + tail[0, 1, 0]

    return crit_sum / n_total + tv_wt * tv_sum


def _reference(inputs, targets, *, tv_wt, loss_type):
    """Pure-JAX reference matching the PyTorch module."""
    x = inputs.astype(jnp.float32)
    t = targets.astype(jnp.float32)
    if loss_type == "l1":
        c = jnp.mean(jnp.abs(x - t))
    else:
        c = jnp.mean((x - t) ** 2)
    if x.ndim == 4:
        tv = jnp.sum((x[:, :, 1:, :] - x[:, :, :-1, :]) ** 2) + jnp.sum(
            (x[:, :, :, 1:] - x[:, :, :, :-1]) ** 2)
    else:
        tv = jnp.sum((x[:, 1:, :] - x[:, :-1, :]) ** 2) + jnp.sum(
            (x[:, :, 1:] - x[:, :, :-1]) ** 2)
    return c + tv_wt * tv


if __name__ == "__main__":
    key = jax.random.PRNGKey(0)
    k1, k2, k3, k4, k5, k6 = jax.random.split(key, 6)
    TV_WT = 0.05

    # 4-D (NCHW) branch, L2 and L1.
    inputs = jax.random.normal(k1, (2, 4, 16, 16), dtype=jnp.float32)
    targets = jax.random.normal(k2, (2, 4, 16, 16), dtype=jnp.float32)

    out_l2 = jax.block_until_ready(
        loss_with_tv(inputs, targets, tv_wt=TV_WT, loss_type="l2"))
    ref_l2 = _reference(inputs, targets, tv_wt=TV_WT, loss_type="l2")
    np.testing.assert_allclose(np.asarray(out_l2), np.asarray(ref_l2),
                               rtol=1e-4, atol=1e-5)

    out_l1 = jax.block_until_ready(
        loss_with_tv(inputs, targets, tv_wt=TV_WT, loss_type="l1"))
    ref_l1 = _reference(inputs, targets, tv_wt=TV_WT, loss_type="l1")
    np.testing.assert_allclose(np.asarray(out_l1), np.asarray(ref_l1),
                               rtol=1e-4, atol=1e-5)

    # 3-D (B, S, D) branch.
    x3 = jax.random.normal(k3, (2, 8, 32), dtype=jnp.float32)
    t3 = jax.random.normal(k4, (2, 8, 32), dtype=jnp.float32)
    out_3d = jax.block_until_ready(
        loss_with_tv(x3, t3, tv_wt=TV_WT, loss_type="l2"))
    ref_3d = _reference(x3, t3, tv_wt=TV_WT, loss_type="l2")
    np.testing.assert_allclose(np.asarray(out_3d), np.asarray(ref_3d),
                               rtol=1e-4, atol=1e-5)

    # Multi-block + in-kernel chunk loop + tail-remainder code paths
    # (forced small tiles: G=40 rows -> 2 blocks of 16 (2 chunks each) + tail of 8).
    x4 = jax.random.normal(k5, (5, 8, 8, 16), dtype=jnp.float32)
    t4 = jax.random.normal(k6, (5, 8, 8, 16), dtype=jnp.float32)
    out_tl = jax.block_until_ready(
        loss_with_tv(x4, t4, tv_wt=TV_WT, loss_type="l2",
                     block_rows=16, chunk_rows=8))
    ref_tl = _reference(x4, t4, tv_wt=TV_WT, loss_type="l2")
    np.testing.assert_allclose(np.asarray(out_tl), np.asarray(ref_tl),
                               rtol=1e-4, atol=1e-5)

    print("KERNEL_OK")
</pallas_src>

<mosaic_0001>
module attributes {stable_mosaic.version = 11 : i64} {
  func.func @kernel(%arg0: i32, %arg1: memref<8x256xf32, #tpu.memory_space<vmem>>, %arg2: memref<8x256xf32, #tpu.memory_space<vmem>>, %arg3: memref<1x2x128xf32, #tpu.memory_space<vmem>>) attributes {dimension_semantics = [#tpu.dimension_semantics<parallel>], iteration_bounds = array<i64: 1>, scalar_prefetch = 0 : i64, scratch_operands = 0 : i64, tpu.core_type = #tpu.core_type<tc>, window_params = [{transform_indices = @transform_0, window_bounds = array<i64: 8, 256>}, {transform_indices = @transform_1, window_bounds = array<i64: 8, 256>}, {transform_indices = @transform_2, window_bounds = array<i64: 1, 2, 128>}]} {
    %0 = tpu.iota {dimensions = array<i32: 1>} : vector<1x256xi32>
    %c16_i32 = arith.constant 16 : i32
    %c0_i32 = arith.constant 0 : i32
    %1 = arith.cmpi eq, %c16_i32, %c0_i32 : i32
    %c1_i32 = arith.constant 1 : i32
    %2 = arith.select %1, %c1_i32, %c16_i32 : i32
    %3 = vector.broadcast %2 : i32 to vector<1x256xi32>
    %4 = arith.remsi %0, %3 : vector<1x256xi32>
    %c0_i32_0 = arith.constant 0 : i32
    %5 = vector.broadcast %c0_i32_0 : i32 to vector<1x256xi32>
    %6 = arith.cmpi ne, %4, %5 : vector<1x256xi32>
    %c0_i32_1 = arith.constant 0 : i32
    %7 = vector.broadcast %c0_i32_1 : i32 to vector<1x256xi32>
    %8 = arith.cmpi slt, %4, %7 : vector<1x256xi32>
    %c0_i32_2 = arith.constant 0 : i32
    %9 = arith.cmpi slt, %2, %c0_i32_2 : i32
    %10 = vector.broadcast %9 : i1 to vector<1x256xi1>
    %11 = vector.broadcast %10 : vector<1x256xi1> to vector<1x256xi1>
    %12 = arith.xori %8, %11 : vector<1x256xi1>
    %13 = arith.andi %12, %6 : vector<1x256xi1>
    %14 = vector.broadcast %2 : i32 to vector<1x256xi32>
    %15 = arith.addi %4, %14 : vector<1x256xi32>
    %16 = arith.select %13, %15, %4 : vector<1x256xi1>, vector<1x256xi32>
    %c0_i32_3 = arith.constant 0 : i32
    %17 = vector.broadcast %c0_i32_3 : i32 to vector<1x256xi32>
    %18 = arith.cmpi ne, %16, %17 : vector<1x256xi32>
    %19 = arith.extui %18 : vector<1x256xi1> to vector<1x256xi32>
    %20 = arith.sitofp %19 : vector<1x256xi32> to vector<1x256xf32>
    %c16_i32_4 = arith.constant 16 : i32
    %21 = vector.broadcast %c16_i32_4 : i32 to vector<1x256xi32>
    %22 = arith.cmpi sge, %0, %21 : vector<1x256xi32>
    %23 = arith.extui %22 : vector<1x256xi1> to vector<1x256xi32>
    %24 = arith.sitofp %23 : vector<1x256xi32> to vector<1x256xf32>
    %cst = arith.constant 0.000000e+00 : f32
    %25 = vector.broadcast %cst : f32 to vector<1x2x128xf32>
    %c0 = arith.constant 0 : index
    %c0_5 = arith.constant 0 : index
    %c0_6 = arith.constant 0 : index
    %26 = vector.load %arg3[%c0, %c0_5, %c0_6] : memref<1x2x128xf32, #tpu.memory_space<vmem>>, vector<1x2x128xf32>
    tpu.vector_store %arg3[%c0, %c0_5, %c0_6], %25 {strides = array<i32>} : memref<1x2x128xf32, #tpu.memory_space<vmem>>, vector<1x2x128xf32>,
    %c0_7 = arith.constant 0 : index
    %c0_8 = arith.constant 0 : index
    %27 = vector.load %arg1[%c0_7, %c0_8] : memref<8x256xf32, #tpu.memory_space<vmem>>, vector<8x256xf32>
    %c0_9 = arith.constant 0 : index
    %c0_10 = arith.constant 0 : index
    %28 = vector.load %arg2[%c0_9, %c0_10] : memref<8x256xf32, #tpu.memory_space<vmem>>, vector<8x256xf32>
    %29 = arith.subf %27, %28 : vector<8x256xf32>
    %30 = arith.mulf %29, %29 : vector<8x256xf32>
    %31 = vector.shape_cast %30 : vector<8x256xf32> to vector<1x8x256xf32>
    %cst_11 = arith.constant dense<0.000000e+00> : vector<1xf32>
    %32 = vector.multi_reduction <add>, %31, %cst_11 [1, 2] : vector<1x8x256xf32> to vector<1xf32>
    %33 = vector.shape_cast %32 : vector<1xf32> to vector<1x1x1xf32>
    %34 = vector.extract %33[0, 0, 0] : f32 from vector<1x1x1xf32>
    %c1_i32_12 = arith.constant 1 : i32
    %35 = tpu.dynamic_rotate %27 by %c1_i32_12 dim 1 : vector<8x256xf32>, i32 -> vector<8x256xf32>
    %36 = arith.subf %27, %35 : vector<8x256xf32>
    %c16_i32_13 = arith.constant 16 : i32
    %37 = tpu.dynamic_rotate %27 by %c16_i32_13 dim 1 : vector<8x256xf32>, i32 -> vector<8x256xf32>
    %38 = arith.subf %27, %37 : vector<8x256xf32>
    %39 = arith.mulf %36, %36 : vector<8x256xf32>
    %40 = vector.broadcast %20 : vector<1x256xf32> to vector<8x256xf32>
    %41 = arith.mulf %39, %40 : vector<8x256xf32>
    %42 = vector.shape_cast %41 : vector<8x256xf32> to vector<1x8x256xf32>
    %cst_14 = arith.constant dense<0.000000e+00> : vector<1xf32>
    %43 = vector.multi_reduction <add>, %42, %cst_14 [1, 2] : vector<1x8x256xf32> to vector<1xf32>
    %44 = vector.shape_cast %43 : vector<1xf32> to vector<1x1x1xf32>
    %45 = vector.extract %44[0, 0, 0] : f32 from vector<1x1x1xf32>
    %46 = arith.mulf %38, %38 : vector<8x256xf32>
    %47 = vector.broadcast %24 : vector<1x256xf32> to vector<8x256xf32>
    %48 = arith.mulf %46, %47 : vector<8x256xf32>
    %49 = vector.shape_cast %48 : vector<8x256xf32> to vector<1x8x256xf32>
    %cst_15 = arith.constant dense<0.000000e+00> : vector<1xf32>
    %50 = vector.multi_reduction <add>, %49, %cst_15 [1, 2] : vector<1x8x256xf32> to vector<1xf32>
    %51 = vector.shape_cast %50 : vector<1xf32> to vector<1x1x1xf32>
    %52 = vector.extract %51[0, 0, 0] : f32 from vector<1x1x1xf32>
    %53 = arith.addf %45, %52 : f32
    %c0_16 = arith.constant 0 : index
    %c0_17 = arith.constant 0 : index
    %c0_18 = arith.constant 0 : index
    %54 = vector.load %arg3[%c0_16, %c0_17, %c0_18] : memref<1x2x128xf32, #tpu.memory_space<vmem>>, vector<1x1x128xf32>
    %55 = vector.broadcast %34 : f32 to vector<1x1x128xf32>
    %56 = arith.addf %54, %55 : vector<1x1x128xf32>
    %c0_19 = arith.constant 0 : index
    %c0_20 = arith.constant 0 : index
    %c0_21 = arith.constant 0 : index
    %57 = vector.load %arg3[%c0_19, %c0_20, %c0_21] : memref<1x2x128xf32, #tpu.memory_space<vmem>>, vector<1x1x128xf32>
    tpu.vector_store %arg3[%c0_19, %c0_20, %c0_21], %56 {strides = array<i32>} : memref<1x2x128xf32, #tpu.memory_space<vmem>>, vector<1x1x128xf32>,
    %c0_22 = arith.constant 0 : index
    %c1 = arith.constant 1 : index
    %c0_23 = arith.constant 0 : index
    %58 = vector.load %arg3[%c0_22, %c1, %c0_23] : memref<1x2x128xf32, #tpu.memory_space<vmem>>, vector<1x1x128xf32>
    %59 = vector.broadcast %53 : f32 to vector<1x1x128xf32>
    %60 = arith.addf %58, %59 : vector<1x1x128xf32>
    %c0_24 = arith.constant 0 : index
    %c1_25 = arith.constant 1 : index
    %c0_26 = arith.constant 0 : index
    %61 = vector.load %arg3[%c0_24, %c1_25, %c0_26] : memref<1x2x128xf32, #tpu.memory_space<vmem>>, vector<1x1x128xf32>
    tpu.vector_store %arg3[%c0_24, %c1_25, %c0_26], %60 {strides = array<i32>} : memref<1x2x128xf32, #tpu.memory_space<vmem>>, vector<1x1x128xf32>,
    return
  }
  func.func @transform_0(%arg0: i32) -> (i32, i32) {
    %c0_i32 = arith.constant 0 : i32
    %c0_i32_0 = arith.constant 0 : i32
    return %arg0, %c0_i32 : i32, i32
  }
  func.func @transform_1(%arg0: i32) -> (i32, i32) {
    %c0_i32 = arith.constant 0 : i32
    %c0_i32_0 = arith.constant 0 : i32
    return %arg0, %c0_i32 : i32, i32
  }
  func.func @transform_2(%arg0: i32) -> (i32, i32, i32) {
    %c0_i32 = arith.constant 0 : i32
    %c0_i32_0 = arith.constant 0 : i32
    %c0_i32_1 = arith.constant 0 : i32
    return %arg0, %c0_i32, %c0_i32_0 : i32, i32, i32
  }
}

</mosaic_0001>

<llo_original>
// kernel: tpu_custom_call.1
$region0: #{tpu_custom_call.1}
  #allocation0 [shape = 'u32[]', space=smem, size = 0x4, offset = 0x4, fixed_abs, tag = 'smem constant byte address 0x4 - core index']
  #allocation1 [shape = 'u32[144,128]{1,0:T(1,128)}', space=vmem, size = 0x12000, scoped, tag = 'internal scratch']
  %s0 = inlined_call_operand.hbm [shape: f32[8,256], index: 0, kind: input, shape index: {}]
  %s1 = inlined_call_operand.hbm [shape: f32[8,256], index: 1, kind: input, shape index: {}]
  %s2 = inlined_call_operand.hbm [shape: f32[1,2,128], index: 2, kind: output, shape index: {}]
  %s3 = sld [smem:[#allocation0]]
  $region26: #{tpu_custom_call.1} parent=0
    _
  %s5 = ssub.s32 1, %s3
  %s6 = scalar_select 0, %s5, %s3
  $region1: #{tpu_custom_call.1} parent=0
    #allocation2 [shape = 'u8[8192]{0}', space=vmem, size = 0x2000, scoped, tag = 'input window, operand 0, single buffered']
    #allocation3 [shape = 's32[1]{0}', space=sflag, size = 0x4, scoped, tag = 'scoped memory for tpu_custom_call.1']
    #allocation4 [shape = 's32[1]{0}', space=sflag, size = 0x4, scoped, tag = 'scoped memory for tpu_custom_call.1']
    #allocation5 [shape = 'u8[8192]{0}', space=vmem, size = 0x2000, scoped, tag = 'input window, operand 1, single buffered']
    #allocation6 [shape = 's32[1]{0}', space=sflag, size = 0x4, scoped, tag = 'scoped memory for tpu_custom_call.1']
    #allocation7 [shape = 'u8[1024]{0}', space=vmem, size = 0x400, scoped, tag = 'output window, operand 0, single buffered']
    %7 = vsyncpa [#allocation3], 0
    %8 = vsyncpa [#allocation6], 0
    %9 = vsyncpa [#allocation4], 0
    // Predicated region
    $region2: #{tpu_custom_call.1} parent=1 // pred_check
      _
    $region3: #{tpu_custom_call.1} parent=1 // pred_check_branch
      %11 = sbr.rel (0) target = $region5
    $region4: #{tpu_custom_call.1} parent=1 // pred_region
      %s13 = ssub.s32 256, 256
      %14 = vsyncadd [#allocation3], %s13
      %s16 = sshll.u32 [#allocation2], 4
      %s17 = int_to_ptr.vmem [resolvable:$true] %s16
      %19 = dma.hbm_to_vmem [thread:$0]  %s0, 256, %s17, [#allocation3]
    $region5: #{tpu_custom_call.1} parent=1 // pred_fallthru
      _
    // Predicated region
    $region6: #{tpu_custom_call.1} parent=1 // pred_check
      _
    $region7: #{tpu_custom_call.1} parent=1 // pred_check_branch
      %21 = sbr.rel (0) target = $region9
    $region8: #{tpu_custom_call.1} parent=1 // pred_region
      %s23 = ssub.s32 256, 256
      %24 = vsyncadd [#allocation6], %s23
      %s26 = sshll.u32 [#allocation5], 4
      %s27 = int_to_ptr.vmem [resolvable:$true] %s26
      %29 = dma.hbm_to_vmem [thread:$0]  %s1, 256, %s27, [#allocation6]
    $region9: #{tpu_custom_call.1} parent=1 // pred_fallthru
      _
    // Predicated region
    $region10: #{tpu_custom_call.1} parent=1 // pred_check
      _
    $region11: #{tpu_custom_call.1} parent=1 // pred_check_branch
      %31 = sbr.rel (0) target = $region13
    $region12: #{tpu_custom_call.1} parent=1 // pred_region
      %32 = dma.done [#allocation3], 256
    $region13: #{tpu_custom_call.1} parent=1 // pred_fallthru
      _
    // Predicated region
    $region14: #{tpu_custom_call.1} parent=1 // pred_check
      _
    $region15: #{tpu_custom_call.1} parent=1 // pred_check_branch
      %34 = sbr.rel (0) target = $region17
    $region16: #{tpu_custom_call.1} parent=1 // pred_region
      %35 = dma.done [#allocation6], 256
    $region17: #{tpu_custom_call.1} parent=1 // pred_fallthru
      _
    %v36 = vlaneseq
    %v37 = vand.u32 %v36, 127
    %v38 = vadd.s32 %v37, 128
    %vm39 = vcmp.lt.s32.totalorder %v37, 0
    %v40 = vsub.s32 0, %v37
    %v41 = vsel %vm39, %v40, %v37
    %v42 = vshrl.u32 %v41, 4
    %v43 = vand.u32 %v41, 15
    %v44 = vsub.s32 0, %v43
    %v45 = vsel %vm39, %v44, %v43
    %vm46 = vcmp.lt.s32.totalorder %v38, 0
    %v47 = vsub.s32 0, %v38
    %v48 = vsel %vm46, %v47, %v38
    %v49 = vshrl.u32 %v48, 4
    %v50 = vand.u32 %v48, 15
    %v51 = vsub.s32 0, %v50
    %v52 = vsel %vm46, %v51, %v50
    %vm53 = vcmp.ne.s32.totalorder %v45, 0
    %vm54 = vcmp.ne.s32.totalorder %v52, 0
    %vm55 = vcmp.lt.s32.totalorder %v45, 0
    %vm56 = vcmp.lt.s32.totalorder %v52, 0
    %vm57 = vmand %vm55, %vm53
    %vm58 = vmand %vm56, %vm54
    %v59 = vadd.s32 %v45, 16
    %v60 = vadd.s32 %v52, 16
    %v61 = vsel %vm57, %v59, %v45
    %v62 = vsel %vm58, %v60, %v52
    %vm63 = vcmp.ne.s32.totalorder %v61, 0
    %vm64 = vcmp.ne.s32.totalorder %v62, 0
    %v65 = vsel %vm63, 1, 0
    %v66 = vsel %vm64, 1, 0
    %v67 = vcvt.s32.f32 %v65
    %v68 = vcvt.s32.f32 %v66
    %vm69 = vcmp.ge.s32.totalorder %v37, 16
    %vm70 = vcmp.ge.s32.totalorder %v38, 16
    %v71 = vsel %vm69, 1, 0
    %v72 = vsel %vm70, 1, 0
    %v73 = vcvt.s32.f32 %v71
    %v74 = vcvt.s32.f32 %v72
    %75 = vst [vmem:[#allocation7] sm:$0x3] 0.0
    %v76 = vld [vmem:[#allocation2] sm:$0xff]
    %v77 = vld [vmem:[#allocation2 + $0x8] sm:$0xff]
    %v78 = vld [vmem:[#allocation5] sm:$0xff]
    %v79 = vld [vmem:[#allocation5 + $0x8] sm:$0xff]
    %v80 = vsub.f32 %v76, %v78
    %v81 = vsub.f32 %v77, %v79
    %v82 = vmul.f32 %v80, %v80
    %v83 = vmul.f32 %v81, %v81
    %v84 = vadd.f32 %v82, %v83
    %85 = vadd.xlane.f32.xlu0 %v84
    %v86 = vpop.xlane.xlu0 %85
    %v87 = vrot.slane %v86, 4
    %v88 = vadd.f32 %v86, %v87
    %v89 = vrot.slane %v88, 2
    %v90 = vadd.f32 %v88, %v89
    %v91 = vrot.slane %v90, 1
    %v92 = vadd.f32 %v90, %v91
    %s93 = vtos %v92
    %94 = vrot.lane.b32.xlu0 %v76, 1
    %v95 = vpop.permute.xlu0 %94
    %96 = vrot.lane.b32.xlu0 %v77, 1
    %v97 = vpop.permute.xlu0 %96
    %vm98 = vcmp.lt.s32.totalorder %v37, 1
    %v99 = vsel %vm98, %v95, %v97
    %v100 = vsel %vm98, %v97, %v95
    %v101 = vsub.f32 %v76, %v100
    %v102 = vsub.f32 %v77, %v99
    %103 = vrot.lane.b32.xlu0 %v76, 16
    %v104 = vpop.permute.xlu0 %103
    %105 = vrot.lane.b32.xlu0 %v77, 16
    %v106 = vpop.permute.xlu0 %105
    %vm107 = vcmp.lt.s32.totalorder %v37, 16
    %v108 = vsel %vm107, %v104, %v106
    %v109 = vsel %vm107, %v106, %v104
    %v110 = vsub.f32 %v76, %v109
    %v111 = vsub.f32 %v77, %v108
    %v112 = vmul.f32 %v101, %v101
    %v113 = vmul.f32 %v102, %v102
    %v114 = vmul.f32 %v112, %v67
    %v115 = vmul.f32 %v113, %v68
    %v116 = vadd.f32 %v114, %v115
    %117 = vadd.xlane.f32.xlu0 %v116
    %v118 = vpop.xlane.xlu0 %117
    %v119 = vrot.slane %v118, 4
    %v120 = vadd.f32 %v118, %v119
    %v121 = vrot.slane %v120, 2
    %v122 = vadd.f32 %v120, %v121
    %v123 = vrot.slane %v122, 1
    %v124 = vadd.f32 %v122, %v123
    %s125 = vtos %v124
    %v126 = vmul.f32 %v110, %v110
    %v127 = vmul.f32 %v111, %v111
    %v128 = vmul.f32 %v126, %v73
    %v129 = vmul.f32 %v127, %v74
    %v130 = vadd.f32 %v128, %v129
    %131 = vadd.xlane.f32.xlu0 %v130
    %v132 = vpop.xlane.xlu0 %131
    %v133 = vrot.slane %v132, 4
    %v134 = vadd.f32 %v132, %v133
    %v135 = vrot.slane %v134, 2
    %v136 = vadd.f32 %v134, %v135
    %v137 = vrot.slane %v136, 1
    %v138 = vadd.f32 %v136, %v137
    %s139 = vtos %v138
    %s140 = sadd.f32 %s125, %s139
    %v141 = vld [vmem:[#allocation7] sm:$0x1]
    %v142 = vstv %s93
    %v143 = vadd.f32 %v141, %v142
    %144 = vst [vmem:[#allocation7] sm:$0x1] %v143
    %v145 = vld [vmem:[#allocation7 + $0x1] sm:$0x1]
    %v146 = vstv %s140
    %v147 = vadd.f32 %v145, %v146
    %148 = vst [vmem:[#allocation7 + $0x1] sm:$0x1] %v147
    // Predicated region
    $region18: #{tpu_custom_call.1} parent=1 // pred_check
      _
    $region19: #{tpu_custom_call.1} parent=1 // pred_check_branch
      %150 = sbr.rel (0) target = $region21
    $region20: #{tpu_custom_call.1} parent=1 // pred_region
      %s152 = ssub.s32 32, 32
      %153 = vsyncadd [#allocation4], %s152
      %s155 = sshll.u32 [#allocation7], 4
      %s156 = int_to_ptr.vmem [resolvable:$true] %s155
      %158 = dma.vmem_to_hbm [thread:$0]  %s156, 32, %s2, [#allocation4]
    $region21: #{tpu_custom_call.1} parent=1 // pred_fallthru
      _
    // Predicated region
    $region22: #{tpu_custom_call.1} parent=1 // pred_check
      _
    $region23: #{tpu_custom_call.1} parent=1 // pred_check_branch
      %160 = sbr.rel (0) target = $region25
    $region24: #{tpu_custom_call.1} parent=1 // pred_region
      %161 = dma.done [#allocation4], 32
    $region25: #{tpu_custom_call.1} parent=1 // pred_fallthru
      _
    %162 = vsyncpa [#allocation3], 1
    %163 = vsyncpa [#allocation6], 1
    %164 = vsyncpa [#allocation4], 1

</llo_original>
